<compile_context>
chip_gen: v7x
topology: tpu7x:2x2x1
jax: 0.10.0
libtpu: 0.0.40
codegen_flags: <defaults>
</compile_context>

<pallas_src>
import functools

import jax
import jax.numpy as jnp
from jax.experimental import pallas as pl
from jax.experimental.pallas import tpu as pltpu

_NUM_CORES = 2  # leading 'parallel' grid axis; serial (and harmless) on 1-TC chips


def _ls_ce_kernel(x_ref, t_ref, smooth_ref, nll_ref, cnt_ref, *,
                  n_rows, n_classes, tile_m, tiles_per_core, ignore_index):
    """Per row-tile: accumulate sum(-sum_c logp), sum(valid nll), count(valid)."""
    c = pl.program_id(0)      # core slot (parallel)
    i = pl.program_id(1)      # row-tile step within this core (arbitrary)

    @pl.when(i == 0)
    def _init():
        smooth_ref[...] = jnp.zeros_like(smooth_ref)
        nll_ref[...] = jnp.zeros_like(nll_ref)
        cnt_ref[...] = jnp.zeros_like(cnt_ref)

    x = x_ref[...]                                            # (TM, C), HBM dtype
    t = t_ref[...]                                            # (TM, 1) int32

    # Row validity from the UNclamped block index (index_map clamps the DMA,
    # so a duplicated last block is fully masked out here).
    blk = c * tiles_per_core + i
    row_idx = blk * tile_m + jax.lax.broadcasted_iota(jnp.int32, (tile_m, 1), 0)
    in_bounds = row_idx < n_rows                              # (TM, 1) bool

    # Row max and target gather in the input dtype (max / compare+select are
    # exact); the only (TM, C) f32 temporary is xm below.
    m = jnp.max(x, axis=-1, keepdims=True)                    # (TM, 1)
    col = jax.lax.broadcasted_iota(jnp.int32, x.shape, 1)     # (TM, C)
    x_t = jnp.sum(jnp.where(col == t, x, jnp.zeros_like(x)),
                  axis=-1, keepdims=True)                     # (TM, 1), exact

    m_f32 = m.astype(jnp.float32)
    xm = x.astype(jnp.float32) - m_f32                        # (TM, C) f32
    s = jnp.sum(jnp.exp(xm), axis=-1, keepdims=True)          # (TM, 1)
    logs = jnp.log(s)                                         # (TM, 1): lse = m + logs
    sum_xm = jnp.sum(xm, axis=-1, keepdims=True)              # (TM, 1)

    # Smoothing term per row: -sum_c logp = C*lse - sum_c x = C*logs - sum_xm.
    rowsum = n_classes * logs - sum_xm                        # (TM, 1)
    rowsum = jnp.where(in_bounds, rowsum, 0.0)                # NaN/Inf-safe mask

    # NLL term: -logp[i, t_i] = lse - x_t = logs - (x_t - m).
    xm_t = x_t.astype(jnp.float32) - m_f32                    # (TM, 1)
    valid_bool = jnp.logical_and(t != ignore_index, in_bounds)
    nll_rows = jnp.where(valid_bool, logs - xm_t, 0.0)        # (TM, 1)

    # Fold the row (sublane) dimension; outputs are per-core (1,1,1) accumulators.
    smooth_ref[...] += jnp.sum(rowsum, axis=0, keepdims=True).reshape(1, 1, 1)
    nll_ref[...] += jnp.sum(nll_rows, axis=0, keepdims=True).reshape(1, 1, 1)
    cnt_ref[...] += jnp.sum(valid_bool.astype(jnp.float32),
                            axis=0, keepdims=True).reshape(1, 1, 1)


def _pick_tile_m(n_rows, n_classes, itemsize, budget_bytes):
    """Largest row tile whose VMEM footprint (double-buffered input block plus
    the in-kernel f32 working set) fits the budget."""
    sub = 8 if itemsize >= 4 else 16            # sublane packing: f32 vs bf16/fp8
    # Per-row bytes: 2x input block (double-buffered) + xm f32 + exp(xm) f32
    # + target/row scalars.
    per_row = 2 * n_classes * itemsize + 8 * n_classes + 16
    t = budget_bytes // max(1, per_row)
    t = int(min(max(t, sub), 4096))             # byte-derived, capped at 4k rows
    t = (t // sub) * sub
    n_pad = -(-n_rows // sub) * sub             # no point tiling wider than N
    return max(sub, min(t, n_pad))


def label_smoothing_cross_entropy(output, target, *, eps=0.1, reduction="mean",
                                  ignore_index=-100, tile_m=None,
                                  vmem_limit_bytes=48 * 1024 * 1024):
    """output: (N, C) float logits; target: (N,) int labels."""
    if reduction not in ("mean", "sum"):
        # TODO(synk): reduction='none' (per-row loss vector) is not implemented.
        raise NotImplementedError("only 'mean' and 'sum' reductions are supported")

    N, C = output.shape
    itemsize = jnp.dtype(output.dtype).itemsize
    sub = 8 if itemsize >= 4 else 16
    if tile_m is None:
        tile_m = _pick_tile_m(N, C, itemsize, budget_bytes=(3 * vmem_limit_bytes) // 4)
    else:
        tile_m = max(sub, (int(tile_m) // sub) * sub)

    tiles_needed = pl.cdiv(N, tile_m)
    tiles_per_core = pl.cdiv(tiles_needed, _NUM_CORES)
    last_blk = tiles_needed - 1

    t2d = target.astype(jnp.int32).reshape(N, 1)

    kernel = functools.partial(_ls_ce_kernel, n_rows=N, n_classes=C,
                               tile_m=tile_m, tiles_per_core=tiles_per_core,
                               ignore_index=ignore_index)

    # Clamp the row-block index so every DMA stays in bounds; the kernel masks
    # duplicated / padded rows via the UNclamped index.
    def row_map(c, i, _tpc=tiles_per_core, _last=last_blk):
        return (jnp.minimum(c * _tpc + i, _last), 0)

    cost = pl.CostEstimate(
        flops=5 * N * C,
        transcendentals=N * C,
        bytes_accessed=N * C * itemsize + N * 4 + 3 * _NUM_CORES * 4,
    )

    smooth_p, nll_p, cnt_p = pl.pallas_call(
        kernel,
        out_shape=(
            jax.ShapeDtypeStruct((_NUM_CORES, 1, 1), jnp.float32),
            jax.ShapeDtypeStruct((_NUM_CORES, 1, 1), jnp.float32),
            jax.ShapeDtypeStruct((_NUM_CORES, 1, 1), jnp.float32),
        ),
        grid_spec=pltpu.PrefetchScalarGridSpec(
            num_scalar_prefetch=0,
            grid=(_NUM_CORES, tiles_per_core),
            in_specs=[
                pl.BlockSpec((tile_m, C), row_map),
                pl.BlockSpec((tile_m, 1), row_map),
            ],
            out_specs=[
                pl.BlockSpec((1, 1, 1), lambda c, i: (c, 0, 0)),
                pl.BlockSpec((1, 1, 1), lambda c, i: (c, 0, 0)),
                pl.BlockSpec((1, 1, 1), lambda c, i: (c, 0, 0)),
            ],
        ),
        compiler_params=pltpu.CompilerParams(
            # Leading core axis is megacore-parallel; the row-tile axis carries
            # the per-core (1,1,1) accumulators so it must be 'arbitrary'.
            dimension_semantics=("parallel", "arbitrary"),
            vmem_limit_bytes=vmem_limit_bytes,
        ),
        cost_estimate=cost,
    )(output, t2d)

    # Tiny XLA epilogue: combine the per-core partials.
    smooth_sum = jnp.sum(smooth_p)
    nll_sum = jnp.sum(nll_p)
    valid_cnt = jnp.sum(cnt_p)

    if reduction == "sum":
        smooth = smooth_sum
        nll = nll_sum
    else:  # 'mean'
        smooth = smooth_sum / N
        # Guard the all-ignored batch (PyTorch's nll_loss mean would return NaN).
        nll = nll_sum / jnp.maximum(valid_cnt, 1.0)

    return smooth * eps / C + (1.0 - eps) * nll


def _reference(output, target, eps=0.1, reduction="mean", ignore_index=-100):
    """Pure-JAX reference mirroring the PyTorch forward."""
    logp = jax.nn.log_softmax(output.astype(jnp.float32), axis=-1)
    C = output.shape[-1]
    valid = target != ignore_index
    safe_t = jnp.where(valid, target, 0).astype(jnp.int32)
    picked = jnp.take_along_axis(logp, safe_t[:, None], axis=-1)[:, 0]
    nll_rows = jnp.where(valid, -picked, 0.0)
    if reduction == "sum":
        smooth = -jnp.sum(logp)
        nll = jnp.sum(nll_rows)
    else:  # 'mean'
        smooth = jnp.mean(-jnp.sum(logp, axis=-1))
        nll = jnp.sum(nll_rows) / jnp.maximum(jnp.sum(valid.astype(jnp.float32)), 1.0)
    return smooth * eps / C + (1.0 - eps) * nll


if __name__ == "__main__":
    key = jax.random.PRNGKey(0)
    k1, k2 = jax.random.split(key)

    # Small shapes; N deliberately NOT a multiple of the tile to exercise the
    # clamped-grid + row-mask path.  C on lanes.
    N, C = 30, 128
    x = jax.random.normal(k1, (N, C), dtype=jnp.float32)
    t = jax.random.randint(k2, (N,), 0, C, dtype=jnp.int32)
    t = t.at[3].set(-100).at[11].set(-100)   # exercise ignore_index

    # 1) auto-sized tile (one useful step, second core fully masked), 'mean'.
    ref_mean = _reference(x, t, eps=0.1, reduction="mean")
    loss = jax.block_until_ready(
        label_smoothing_cross_entropy(x, t, eps=0.1, reduction="mean"))
    assert jnp.allclose(loss, ref_mean, rtol=1e-5, atol=1e-5), (loss, ref_mean)

    # 2) forced small tile -> multi-step per-core accumulation across the grid.
    loss2 = jax.block_until_ready(
        label_smoothing_cross_entropy(x, t, eps=0.1, reduction="mean", tile_m=8))
    assert jnp.allclose(loss2, ref_mean, rtol=1e-5, atol=1e-5), (loss2, ref_mean)

    # 3) 'sum' reduction (smoothing term sums over ALL rows, matching PyTorch).
    ref_sum = _reference(x, t, eps=0.1, reduction="sum")
    loss3 = jax.block_until_ready(
        label_smoothing_cross_entropy(x, t, eps=0.1, reduction="sum", tile_m=16))
    assert jnp.allclose(loss3, ref_sum, rtol=1e-5, atol=1e-5), (loss3, ref_sum)

    # 4) bf16 logits stay bf16 through the DMA; max/gather in bf16, f32 math after.
    xb = x.astype(jnp.bfloat16)
    ref_bf16 = _reference(xb, t, eps=0.1, reduction="mean")
    loss4 = jax.block_until_ready(
        label_smoothing_cross_entropy(xb, t, eps=0.1, reduction="mean"))
    assert jnp.allclose(loss4, ref_bf16, rtol=1e-5, atol=1e-4), (loss4, ref_bf16)

    print("KERNEL_OK")
</pallas_src>

<mosaic_0001>
module attributes {stable_mosaic.version = 11 : i64} {
  func.func @_ls_ce_kernel(%arg0: i32, %arg1: i32, %arg2: memref<32x128xf32, #tpu.memory_space<vmem>>, %arg3: memref<32x1xi32, #tpu.memory_space<vmem>>, %arg4: memref<1x1x1xf32, #tpu.memory_space<vmem>>, %arg5: memref<1x1x1xf32, #tpu.memory_space<vmem>>, %arg6: memref<1x1x1xf32, #tpu.memory_space<vmem>>) attributes {dimension_semantics = [#tpu.dimension_semantics<parallel>, #tpu.dimension_semantics<arbitrary>], iteration_bounds = array<i64: 2, 1>, scalar_prefetch = 0 : i64, scratch_operands = 0 : i64, tpu.core_type = #tpu.core_type<tc>, window_params = [{transform_indices = @transform_0, window_bounds = array<i64: 32, 128>}, {transform_indices = @transform_1, window_bounds = array<i64: 32, 1>}, {transform_indices = @transform_2, window_bounds = array<i64: 1, 1, 1>}, {transform_indices = @transform_3, window_bounds = array<i64: 1, 1, 1>}, {transform_indices = @transform_4, window_bounds = array<i64: 1, 1, 1>}]} {
    %c0_i32 = arith.constant 0 : i32
    %0 = arith.cmpi eq, %arg1, %c0_i32 : i32
    %1 = arith.extui %0 : i1 to i32
    %c0_i32_0 = arith.constant 0 : i32
    %2 = arith.cmpi ne, %1, %c0_i32_0 : i32
    scf.if %2 {
      %cst_32 = arith.constant 0.000000e+00 : f32
      %62 = vector.broadcast %cst_32 : f32 to vector<1x1x1xf32>
      %c0_33 = arith.constant 0 : index
      %c0_34 = arith.constant 0 : index
      %c0_35 = arith.constant 0 : index
      %63 = vector.load %arg4[%c0_33, %c0_34, %c0_35] : memref<1x1x1xf32, #tpu.memory_space<vmem>>, vector<1x1x1xf32>
      tpu.vector_store %arg4[%c0_33, %c0_34, %c0_35], %62 {strides = array<i32>} : memref<1x1x1xf32, #tpu.memory_space<vmem>>, vector<1x1x1xf32>,
      %cst_36 = arith.constant 0.000000e+00 : f32
      %64 = vector.broadcast %cst_36 : f32 to vector<1x1x1xf32>
      %c0_37 = arith.constant 0 : index
      %c0_38 = arith.constant 0 : index
      %c0_39 = arith.constant 0 : index
      %65 = vector.load %arg5[%c0_37, %c0_38, %c0_39] : memref<1x1x1xf32, #tpu.memory_space<vmem>>, vector<1x1x1xf32>
      tpu.vector_store %arg5[%c0_37, %c0_38, %c0_39], %64 {strides = array<i32>} : memref<1x1x1xf32, #tpu.memory_space<vmem>>, vector<1x1x1xf32>,
      %cst_40 = arith.constant 0.000000e+00 : f32
      %66 = vector.broadcast %cst_40 : f32 to vector<1x1x1xf32>
      %c0_41 = arith.constant 0 : index
      %c0_42 = arith.constant 0 : index
      %c0_43 = arith.constant 0 : index
      %67 = vector.load %arg6[%c0_41, %c0_42, %c0_43] : memref<1x1x1xf32, #tpu.memory_space<vmem>>, vector<1x1x1xf32>
      tpu.vector_store %arg6[%c0_41, %c0_42, %c0_43], %66 {strides = array<i32>} : memref<1x1x1xf32, #tpu.memory_space<vmem>>, vector<1x1x1xf32>,
    } else {
    }
    %c0 = arith.constant 0 : index
    %c0_1 = arith.constant 0 : index
    %3 = vector.load %arg2[%c0, %c0_1] : memref<32x128xf32, #tpu.memory_space<vmem>>, vector<32x128xf32>
    %c0_2 = arith.constant 0 : index
    %c0_3 = arith.constant 0 : index
    %4 = vector.load %arg3[%c0_2, %c0_3] : memref<32x1xi32, #tpu.memory_space<vmem>>, vector<32x1xi32>
    %c1_i32 = arith.constant 1 : i32
    %5 = arith.muli %arg0, %c1_i32 : i32
    %6 = arith.addi %5, %arg1 : i32
    %c32_i32 = arith.constant 32 : i32
    %7 = arith.muli %6, %c32_i32 : i32
    %8 = tpu.iota {dimensions = array<i32: 0>} : vector<32x1xi32>
    %9 = vector.broadcast %7 : i32 to vector<32x1xi32>
    %10 = arith.addi %9, %8 : vector<32x1xi32>
    %c30_i32 = arith.constant 30 : i32
    %11 = vector.broadcast %c30_i32 : i32 to vector<32x1xi32>
    %12 = arith.cmpi slt, %10, %11 : vector<32x1xi32>
    %cst = arith.constant dense<0xFF800000> : vector<32xf32>
    %13 = vector.multi_reduction <maximumf>, %3, %cst [1] : vector<32x128xf32> to vector<32xf32>
    %14 = vector.shape_cast %13 : vector<32xf32> to vector<32x1xf32>
    %15 = tpu.iota {dimensions = array<i32: 1>} : vector<32x128xi32>
    %16 = vector.broadcast %4 : vector<32x1xi32> to vector<32x128xi32>
    %17 = arith.cmpi eq, %15, %16 : vector<32x128xi32>
    %cst_4 = arith.constant 0.000000e+00 : f32
    %18 = vector.broadcast %cst_4 : f32 to vector<32x128xf32>
    %19 = arith.select %17, %3, %18 : vector<32x128xi1>, vector<32x128xf32>
    %cst_5 = arith.constant dense<0.000000e+00> : vector<32xf32>
    %20 = vector.multi_reduction <add>, %19, %cst_5 [1] : vector<32x128xf32> to vector<32xf32>
    %21 = vector.shape_cast %20 : vector<32xf32> to vector<32x1xf32>
    %22 = vector.broadcast %14 : vector<32x1xf32> to vector<32x128xf32>
    %23 = arith.subf %3, %22 : vector<32x128xf32>
    %24 = math.exp %23 : vector<32x128xf32>
    %cst_6 = arith.constant dense<0.000000e+00> : vector<32xf32>
    %25 = vector.multi_reduction <add>, %24, %cst_6 [1] : vector<32x128xf32> to vector<32xf32>
    %26 = vector.shape_cast %25 : vector<32xf32> to vector<32x1xf32>
    %27 = math.log %26 : vector<32x1xf32>
    %cst_7 = arith.constant dense<0.000000e+00> : vector<32xf32>
    %28 = vector.multi_reduction <add>, %23, %cst_7 [1] : vector<32x128xf32> to vector<32xf32>
    %29 = vector.shape_cast %28 : vector<32xf32> to vector<32x1xf32>
    %cst_8 = arith.constant 1.280000e+02 : f32
    %30 = vector.broadcast %cst_8 : f32 to vector<32x1xf32>
    %31 = arith.mulf %30, %27 : vector<32x1xf32>
    %32 = arith.subf %31, %29 : vector<32x1xf32>
    %cst_9 = arith.constant 0.000000e+00 : f32
    %33 = vector.broadcast %cst_9 : f32 to vector<32x1xf32>
    %34 = arith.select %12, %32, %33 : vector<32x1xi1>, vector<32x1xf32>
    %35 = arith.subf %21, %14 : vector<32x1xf32>
    %c-100_i32 = arith.constant -100 : i32
    %36 = vector.broadcast %c-100_i32 : i32 to vector<32x1xi32>
    %37 = arith.cmpi ne, %4, %36 : vector<32x1xi32>
    %38 = arith.andi %37, %12 : vector<32x1xi1>
    %39 = arith.subf %27, %35 : vector<32x1xf32>
    %cst_10 = arith.constant 0.000000e+00 : f32
    %40 = vector.broadcast %cst_10 : f32 to vector<32x1xf32>
    %41 = arith.select %38, %39, %40 : vector<32x1xi1>, vector<32x1xf32>
    %c0_11 = arith.constant 0 : index
    %c0_12 = arith.constant 0 : index
    %c0_13 = arith.constant 0 : index
    %42 = vector.load %arg4[%c0_11, %c0_12, %c0_13] : memref<1x1x1xf32, #tpu.memory_space<vmem>>, vector<1x1x1xf32>
    %cst_14 = arith.constant dense<0.000000e+00> : vector<1xf32>
    %43 = vector.multi_reduction <add>, %34, %cst_14 [0] : vector<32x1xf32> to vector<1xf32>
    %44 = vector.shape_cast %43 : vector<1xf32> to vector<1x1xf32>
    %45 = vector.shape_cast %44 : vector<1x1xf32> to vector<1x1x1xf32>
    %46 = arith.addf %42, %45 : vector<1x1x1xf32>
    %c0_15 = arith.constant 0 : index
    %c0_16 = arith.constant 0 : index
    %c0_17 = arith.constant 0 : index
    %47 = vector.load %arg4[%c0_15, %c0_16, %c0_17] : memref<1x1x1xf32, #tpu.memory_space<vmem>>, vector<1x1x1xf32>
    tpu.vector_store %arg4[%c0_15, %c0_16, %c0_17], %46 {strides = array<i32>} : memref<1x1x1xf32, #tpu.memory_space<vmem>>, vector<1x1x1xf32>,
    %c0_18 = arith.constant 0 : index
    %c0_19 = arith.constant 0 : index
    %c0_20 = arith.constant 0 : index
    %48 = vector.load %arg5[%c0_18, %c0_19, %c0_20] : memref<1x1x1xf32, #tpu.memory_space<vmem>>, vector<1x1x1xf32>
    %cst_21 = arith.constant dense<0.000000e+00> : vector<1xf32>
    %49 = vector.multi_reduction <add>, %41, %cst_21 [0] : vector<32x1xf32> to vector<1xf32>
    %50 = vector.shape_cast %49 : vector<1xf32> to vector<1x1xf32>
    %51 = vector.shape_cast %50 : vector<1x1xf32> to vector<1x1x1xf32>
    %52 = arith.addf %48, %51 : vector<1x1x1xf32>
    %c0_22 = arith.constant 0 : index
    %c0_23 = arith.constant 0 : index
    %c0_24 = arith.constant 0 : index
    %53 = vector.load %arg5[%c0_22, %c0_23, %c0_24] : memref<1x1x1xf32, #tpu.memory_space<vmem>>, vector<1x1x1xf32>
    tpu.vector_store %arg5[%c0_22, %c0_23, %c0_24], %52 {strides = array<i32>} : memref<1x1x1xf32, #tpu.memory_space<vmem>>, vector<1x1x1xf32>,
    %c0_25 = arith.constant 0 : index
    %c0_26 = arith.constant 0 : index
    %c0_27 = arith.constant 0 : index
    %54 = vector.load %arg6[%c0_25, %c0_26, %c0_27] : memref<1x1x1xf32, #tpu.memory_space<vmem>>, vector<1x1x1xf32>
    %55 = arith.extui %38 : vector<32x1xi1> to vector<32x1xi32>
    %56 = arith.sitofp %55 : vector<32x1xi32> to vector<32x1xf32>
    %cst_28 = arith.constant dense<0.000000e+00> : vector<1xf32>
    %57 = vector.multi_reduction <add>, %56, %cst_28 [0] : vector<32x1xf32> to vector<1xf32>
    %58 = vector.shape_cast %57 : vector<1xf32> to vector<1x1xf32>
    %59 = vector.shape_cast %58 : vector<1x1xf32> to vector<1x1x1xf32>
    %60 = arith.addf %54, %59 : vector<1x1x1xf32>
    %c0_29 = arith.constant 0 : index
    %c0_30 = arith.constant 0 : index
    %c0_31 = arith.constant 0 : index
    %61 = vector.load %arg6[%c0_29, %c0_30, %c0_31] : memref<1x1x1xf32, #tpu.memory_space<vmem>>, vector<1x1x1xf32>
    tpu.vector_store %arg6[%c0_29, %c0_30, %c0_31], %60 {strides = array<i32>} : memref<1x1x1xf32, #tpu.memory_space<vmem>>, vector<1x1x1xf32>,
    return
  }
  func.func @transform_0(%arg0: i32, %arg1: i32) -> (i32, i32) {
    %c1_i32 = arith.constant 1 : i32
    %0 = arith.muli %arg0, %c1_i32 : i32
    %1 = arith.addi %0, %arg1 : i32
    %c0_i32 = arith.constant 0 : i32
    %2 = arith.minsi %1, %c0_i32 : i32
    %c0_i32_0 = arith.constant 0 : i32
    %c0_i32_1 = arith.constant 0 : i32
    return %2, %c0_i32_0 : i32, i32
  }
  func.func @transform_1(%arg0: i32, %arg1: i32) -> (i32, i32) {
    %c1_i32 = arith.constant 1 : i32
    %0 = arith.muli %arg0, %c1_i32 : i32
    %1 = arith.addi %0, %arg1 : i32
    %c0_i32 = arith.constant 0 : i32
    %2 = arith.minsi %1, %c0_i32 : i32
    %c0_i32_0 = arith.constant 0 : i32
    %c0_i32_1 = arith.constant 0 : i32
    return %2, %c0_i32_0 : i32, i32
  }
  func.func @transform_2(%arg0: i32, %arg1: i32) -> (i32, i32, i32) {
    %c0_i32 = arith.constant 0 : i32
    %c0_i32_0 = arith.constant 0 : i32
    %c0_i32_1 = arith.constant 0 : i32
    return %arg0, %c0_i32, %c0_i32_0 : i32, i32, i32
  }
  func.func @transform_3(%arg0: i32, %arg1: i32) -> (i32, i32, i32) {
    %c0_i32 = arith.constant 0 : i32
    %c0_i32_0 = arith.constant 0 : i32
    %c0_i32_1 = arith.constant 0 : i32
    return %arg0, %c0_i32, %c0_i32_0 : i32, i32, i32
  }
  func.func @transform_4(%arg0: i32, %arg1: i32) -> (i32, i32, i32) {
    %c0_i32 = arith.constant 0 : i32
    %c0_i32_0 = arith.constant 0 : i32
    %c0_i32_1 = arith.constant 0 : i32
    return %arg0, %c0_i32, %c0_i32_0 : i32, i32, i32
  }
}

</mosaic_0001>

<llo_original>
// kernel: tpu_custom_call.1
$region0: #{tpu_custom_call.1}
  #allocation0 [shape = 'u32[]', space=smem, size = 0x4, offset = 0x4, fixed_abs, tag = 'smem constant byte address 0x4 - core index']
  #allocation1 [shape = 'u32[144,128]{1,0:T(1,128)}', space=vmem, size = 0x12000, scoped, tag = 'internal scratch']
  %s0 = inlined_call_operand.vmem [shape: f32[30,128], index: 0, kind: input, shape index: {}]
  %s1 = inlined_call_operand.vmem [shape: s32[30,1], index: 1, kind: input, shape index: {}]
  %s2 = inlined_call_operand.vmem [shape: f32[2,1,1], index: 2, kind: output, shape index: {0}]
  %s3 = inlined_call_operand.vmem [shape: f32[2,1,1], index: 3, kind: output, shape index: {1}]
  %s4 = inlined_call_operand.vmem [shape: f32[2,1,1], index: 4, kind: output, shape index: {2}]
  %5 = xla_tuple %s2, %s3, %s4
  %s6 = sld [smem:[#allocation0]]
  $region61: #{tpu_custom_call.1} parent=0
    _
  %s8 = ssub.s32 1, %s6
  %s9 = scalar_select 0, %s8, %s6
  loop: start=0, step=1, limit=4
  $region2: #{tpu_custom_call.1} parent=0 // loop_pre_header
    _
  $region3: #{tpu_custom_call.1} parent=0 // loop_header
    %s11 = sphi 0, %s15
    %p12 = scmp.ge.s32.totalorder %s11, 4
    %s18 = sphi 0, %s30
    %s19 = sphi 0, %s26
    %s20 = sphi 0, %s18
    %s21 = sphi 0, %s19
    %s22 = sphi 0, %s20
    %s23 = sphi 0, %s21
    %s39 = sphi 0, %s41
    %s42 = sphi 0, %s39
    %s43 = sphi 0, %s42
    %s59 = sphi 0, %s43
    %s71 = sphi 0, %s73
    %s74 = sphi 0, %s71
    %s75 = sphi 0, %s74
    %s91 = sphi 0, %s75
    %s97 = sphi 0, %s99
    %s100 = sphi 0, %s97
    %s101 = sphi 0, %s100
    %s117 = sphi 0, %s101
    %s123 = sphi 0, %s125
    %s126 = sphi 0, %s123
    %s127 = sphi 0, %s126
    %s143 = sphi 0, %s127
    %s149 = sphi 0, %s151
    %s152 = sphi 0, %s149
    %s153 = sphi 0, %s152
    %s169 = sphi 0, %s153
  $region4: #{tpu_custom_call.1} parent=0 // loop_header_branch
    %14 = sbr.rel (%p12) target = $region8
  $region5: #{tpu_custom_call.1} parent=0 // loop_body
    %s16 = ssub.s32 %s11, 1
    %s17 = ssub.s32 %s11, 2
    %s24 = sadd.s32 1, %s19
    %p25 = scmp.ge.s32.totalorder %s24, 1
    %s26 = scalar_select %p25, 0, %s24
    %s27 = sadd.s32 1, %s18
    %s28 = scalar_select %p25, %s27, %s18
    %p29 = scmp.ge.s32.totalorder %s28, 2
    %s30 = scalar_select %p29, 0, %s28
    %s31 = sadd.s32 %s18, %s19
    %p32 = scmp.lt.s32.totalorder %s31, 0
    %s33 = scalar_select %p32, %s31, 0
    %s34 = sadd.s32 %s30, %s26
    %p35 = scmp.lt.s32.totalorder %s34, 0
    %s36 = scalar_select %p35, %s34, 0
    %s37 = ssub.s32 %s33, %s36
    %p38 = scmp.eq.s32.totalorder %s37, 0
    %s40 = sadd.s32 %s39, 1
    %s41 = scalar_select %p38, %s39, %s40
    %p44 = pneg %p38
    %p45 = scmp.eq.s32.totalorder %s11, 1
    %p46 = por %p44, %p45
    %p47 = scmp.ne.s32.totalorder %s39, %s42
    %p48 = scmp.eq.s32.totalorder %s11, 0
    %p49 = por %p47, %p48
    %p50 = scmp.ne.s32.totalorder %s39, %s42
    %p51 = scmp.eq.s32.totalorder %s16, 1
    %p52 = por %p50, %p51
    %p53 = scmp.ne.s32.totalorder %s42, %s43
    %p54 = scmp.eq.s32.totalorder %s16, 0
    %p55 = por %p53, %p54
    %p56 = scmp.ne.s32.totalorder %s42, %s43
    %p57 = scmp.eq.s32.totalorder %s17, 1
    %p58 = por %p56, %p57
    %p60 = scmp.ne.s32.totalorder %s43, %s59
    %p61 = scmp.eq.s32.totalorder %s17, 0
    %p62 = por %p60, %p61
    %s63 = sadd.s32 %s18, %s19
    %p64 = scmp.lt.s32.totalorder %s63, 0
    %s65 = scalar_select %p64, %s63, 0
    %s66 = sadd.s32 %s30, %s26
    %p67 = scmp.lt.s32.totalorder %s66, 0
    %s68 = scalar_select %p67, %s66, 0
    %s69 = ssub.s32 %s65, %s68
    %p70 = scmp.eq.s32.totalorder %s69, 0
    %s72 = sadd.s32 %s71, 1
    %s73 = scalar_select %p70, %s71, %s72
    %p76 = pneg %p70
    %p77 = scmp.eq.s32.totalorder %s11, 1
    %p78 = por %p76, %p77
    %p79 = scmp.ne.s32.totalorder %s71, %s74
    %p80 = scmp.eq.s32.totalorder %s11, 0
    %p81 = por %p79, %p80
    %p82 = scmp.ne.s32.totalorder %s71, %s74
    %p83 = scmp.eq.s32.totalorder %s16, 1
    %p84 = por %p82, %p83
    %p85 = scmp.ne.s32.totalorder %s74, %s75
    %p86 = scmp.eq.s32.totalorder %s16, 0
    %p87 = por %p85, %p86
    %p88 = scmp.ne.s32.totalorder %s74, %s75
    %p89 = scmp.eq.s32.totalorder %s17, 1
    %p90 = por %p88, %p89
    %p92 = scmp.ne.s32.totalorder %s75, %s91
    %p93 = scmp.eq.s32.totalorder %s17, 0
    %p94 = por %p92, %p93
    %s95 = ssub.s32 %s18, %s30
    %p96 = scmp.eq.s32.totalorder %s95, 0
    %s98 = sadd.s32 %s97, 1
    %s99 = scalar_select %p96, %s97, %s98
    %p102 = pneg %p96
    %p103 = scmp.eq.s32.totalorder %s11, 1
    %p104 = por %p102, %p103
    %p105 = scmp.ne.s32.totalorder %s97, %s100
    %p106 = scmp.eq.s32.totalorder %s11, 0
    %p107 = por %p105, %p106
    %p108 = scmp.ne.s32.totalorder %s97, %s100
    %p109 = scmp.eq.s32.totalorder %s16, 1
    %p110 = por %p108, %p109
    %p111 = scmp.ne.s32.totalorder %s100, %s101
    %p112 = scmp.eq.s32.totalorder %s16, 0
    %p113 = por %p111, %p112
    %p114 = scmp.ne.s32.totalorder %s100, %s101
    %p115 = scmp.eq.s32.totalorder %s17, 1
    %p116 = por %p114, %p115
    %p118 = scmp.ne.s32.totalorder %s101, %s117
    %p119 = scmp.eq.s32.totalorder %s17, 0
    %p120 = por %p118, %p119
    %s121 = ssub.s32 %s18, %s30
    %p122 = scmp.eq.s32.totalorder %s121, 0
    %s124 = sadd.s32 %s123, 1
    %s125 = scalar_select %p122, %s123, %s124
    %p128 = pneg %p122
    %p129 = scmp.eq.s32.totalorder %s11, 1
    %p130 = por %p128, %p129
    %p131 = scmp.ne.s32.totalorder %s123, %s126
    %p132 = scmp.eq.s32.totalorder %s11, 0
    %p133 = por %p131, %p132
    %p134 = scmp.ne.s32.totalorder %s123, %s126
    %p135 = scmp.eq.s32.totalorder %s16, 1
    %p136 = por %p134, %p135
    %p137 = scmp.ne.s32.totalorder %s126, %s127
    %p138 = scmp.eq.s32.totalorder %s16, 0
    %p139 = por %p137, %p138
    %p140 = scmp.ne.s32.totalorder %s126, %s127
    %p141 = scmp.eq.s32.totalorder %s17, 1
    %p142 = por %p140, %p141
    %p144 = scmp.ne.s32.totalorder %s127, %s143
    %p145 = scmp.eq.s32.totalorder %s17, 0
    %p146 = por %p144, %p145
    %s147 = ssub.s32 %s18, %s30
    %p148 = scmp.eq.s32.totalorder %s147, 0
    %s150 = sadd.s32 %s149, 1
    %s151 = scalar_select %p148, %s149, %s150
    %p154 = pneg %p148
    %p155 = scmp.eq.s32.totalorder %s11, 1
    %p156 = por %p154, %p155
    %p157 = scmp.ne.s32.totalorder %s149, %s152
    %p158 = scmp.eq.s32.totalorder %s11, 0
    %p159 = por %p157, %p158
    %p160 = scmp.ne.s32.totalorder %s149, %s152
    %p161 = scmp.eq.s32.totalorder %s16, 1
    %p162 = por %p160, %p161
    %p163 = scmp.ne.s32.totalorder %s152, %s153
    %p164 = scmp.eq.s32.totalorder %s16, 0
    %p165 = por %p163, %p164
    %p166 = scmp.ne.s32.totalorder %s152, %s153
    %p167 = scmp.eq.s32.totalorder %s17, 1
    %p168 = por %p166, %p167
    %p170 = scmp.ne.s32.totalorder %s153, %s169
    %p171 = scmp.eq.s32.totalorder %s17, 0
    %p172 = por %p170, %p171
    %p173 = scmp.le.s32.totalorder 1, %s11
    %p174 = scmp.lt.s32.totalorder %s11, 3
    %p175 = pnand %p173, %p174
    %p176 = pneg %p175
    // Predicated region
    $region9: #{tpu_custom_call.1} parent=5 // pred_check
      _
    $region10: #{tpu_custom_call.1} parent=5 // pred_check_branch
      %178 = sbr.rel (%p175) target = $region12
    $region11: #{tpu_custom_call.1} parent=5 // pred_region
      %s179 = ssub.s32 %s11, 1
    $region12: #{tpu_custom_call.1} parent=5 // pred_fallthru
      _
    %p180 = scmp.lt.s32.totalorder %s11, 2
    // Predicated region
    $region13: #{tpu_custom_call.1} parent=5 // pred_check
      %p181 = pneg %p180
    $region14: #{tpu_custom_call.1} parent=5 // pred_check_branch
      %183 = sbr.rel (%p181) target = $region16
    $region15: #{tpu_custom_call.1} parent=5 // pred_region
      // Predicated region
      $region17: #{tpu_custom_call.1} parent=15 // pred_check
        %p184 = pneg %p49
      $region18: #{tpu_custom_call.1} parent=15 // pred_check_branch
        %186 = sbr.rel (%p184) target = $region20
      $region19: #{tpu_custom_call.1} parent=15 // pred_region
        %s187 = sadd.s32 %s18, %s19
        %p188 = scmp.lt.s32.totalorder %s187, 0
        %s189 = scalar_select %p188, %s187, 0
        %s190 = smul.u32 4, %s189
        %p191 = scmp.lt.s32.totalorder %s190, 3
        %s192 = scalar_select %p191, %s190, 3
        %s193 = smul.addr %s192, 8
        %s194 = scalar_lea.vmem %s0, %s193
        %s195 = sadd.s32 %s18, %s19
        %p196 = scmp.lt.s32.totalorder %s195, 0
        %s197 = scalar_select %p196, %s195, 0
        %s198 = smul.u32 4, %s197
      $region20: #{tpu_custom_call.1} parent=15 // pred_fallthru
        _
      // Predicated region
      $region21: #{tpu_custom_call.1} parent=15 // pred_check
        %p199 = pneg %p81
      $region22: #{tpu_custom_call.1} parent=15 // pred_check_branch
        %201 = sbr.rel (%p199) target = $region24
      $region23: #{tpu_custom_call.1} parent=15 // pred_region
        %s202 = sadd.s32 %s18, %s19
        %p203 = scmp.lt.s32.totalorder %s202, 0
        %s204 = scalar_select %p203, %s202, 0
        %s205 = smul.u32 4, %s204
        %p206 = scmp.lt.s32.totalorder %s205, 3
        %s207 = scalar_select %p206, %s205, 3
        %s208 = smul.addr %s207, 8
        %s209 = scalar_lea.vmem %s1, %s208
        %s210 = sadd.s32 %s18, %s19
        %p211 = scmp.lt.s32.totalorder %s210, 0
        %s212 = scalar_select %p211, %s210, 0
        %s213 = smul.u32 4, %s212
      $region24: #{tpu_custom_call.1} parent=15 // pred_fallthru
        _
    $region16: #{tpu_custom_call.1} parent=5 // pred_fallthru
      _
    %p214 = scmp.le.s32.totalorder 1, %s11
    %p215 = scmp.lt.s32.totalorder %s11, 3
    %p216 = pnand %p214, %p215
    %p217 = pneg %p216
    // Predicated region
    $region25: #{tpu_custom_call.1} parent=5 // pred_check
      _
    $region26: #{tpu_custom_call.1} parent=5 // pred_check_branch
      %219 = sbr.rel (%p216) target = $region28
    $region27: #{tpu_custom_call.1} parent=5 // pred_region
      %s220 = ssub.s32 %s11, 1
      %s221 = sadd.s32 %s20, %s21
      %p222 = scmp.lt.s32.totalorder %s221, 0
      %s223 = scalar_select %p222, %s221, 0
      %s224 = smul.u32 4, %s223
      %p225 = scmp.lt.s32.totalorder %s224, 3
      %s226 = scalar_select %p225, %s224, 3
      %s227 = smul.addr %s226, 8
      %s228 = scalar_lea.vmem %s0, %s227
      %p229 = pneg %p55
      %p230 = pneg %p52
      %s231 = sadd.s32 %s20, %s21
      %p232 = scmp.lt.s32.totalorder %s231, 0
      %s233 = scalar_select %p232, %s231, 0
      %s234 = smul.u32 4, %s233
      %p235 = scmp.lt.s32.totalorder %s234, 3
      %s236 = scalar_select %p235, %s234, 3
      %s237 = smul.addr %s236, 8
      %s238 = scalar_lea.vmem %s1, %s237
      %p239 = pneg %p87
      %p240 = pneg %p84
      %p241 = pneg %p113
      %p242 = pneg %p110
      %p243 = scmp.lt.s32.totalorder %s20, 1
      %s244 = scalar_select %p243, %s20, 1
      %s245 = scalar_lea.vmem %s2, %s244
      %p246 = pneg %p139
      %p247 = pneg %p136
      %p248 = scmp.lt.s32.totalorder %s20, 1
      %s249 = scalar_select %p248, %s20, 1
      %s250 = scalar_lea.vmem %s3, %s249
      %p251 = pneg %p165
      %p252 = pneg %p162
      %p253 = scmp.lt.s32.totalorder %s20, 1
      %s254 = scalar_select %p253, %s20, 1
      %s255 = scalar_lea.vmem %s4, %s254
      %s256 = sadd.s32 %s20, %s21
      %p257 = scmp.lt.s32.totalorder %s256, 0
      %s258 = scalar_select %p257, %s256, 0
      %s259 = smul.u32 4, %s258
      %p260 = scmp.lt.s32.totalorder %s259, 3
      %s261 = scalar_select %p260, %s259, 3
      %s262 = smul.addr %s261, 8
      %s263 = scalar_lea.vmem %s0, %s262
      %s264 = sadd.s32 %s20, %s21
      %p265 = scmp.lt.s32.totalorder %s264, 0
      %s266 = scalar_select %p265, %s264, 0
      %s267 = smul.u32 4, %s266
      %s268 = sadd.s32 %s20, %s21
      %p269 = scmp.lt.s32.totalorder %s268, 0
      %s270 = scalar_select %p269, %s268, 0
      %s271 = smul.u32 4, %s270
      %p272 = scmp.lt.s32.totalorder %s271, 3
      %s273 = scalar_select %p272, %s271, 3
      %s274 = smul.addr %s273, 8
      %s275 = scalar_lea.vmem %s1, %s274
      %s276 = sadd.s32 %s20, %s21
      %p277 = scmp.lt.s32.totalorder %s276, 0
      %s278 = scalar_select %p277, %s276, 0
      %s279 = smul.u32 4, %s278
      %p280 = scmp.lt.s32.totalorder %s20, 1
      %s281 = scalar_select %p280, %s20, 1
      %s282 = scalar_lea.vmem %s2, %s281
      %p283 = scmp.lt.s32.totalorder %s20, 1
      %s284 = scalar_select %p283, %s20, 1
      %s285 = scalar_lea.vmem %s3, %s284
      %p286 = scmp.lt.s32.totalorder %s20, 1
      %s287 = scalar_select %p286, %s20, 1
      %s288 = scalar_lea.vmem %s4, %s287
      %p289 = scmp.eq.s32.totalorder %s21, 0
      // Predicated region
      $region29: #{tpu_custom_call.1} parent=27 // pred_check
        %p290 = pneg %p289
      $region30: #{tpu_custom_call.1} parent=27 // pred_check_branch
        %292 = sbr.rel (%p290) target = $region32
      $region31: #{tpu_custom_call.1} parent=27 // pred_region
        %vm293 = vcmask 0
        %294 = vst.msk [vmem:[%s282] sm:$0x1] %vm293, 0.0
        %295 = vst.msk [vmem:[%s285] sm:$0x1] %vm293, 0.0
        %296 = vst.msk [vmem:[%s288] sm:$0x1] %vm293, 0.0
      $region32: #{tpu_custom_call.1} parent=27 // pred_fallthru
        _
      %v297 = vld [vmem:[%s263] sm:$0xff]
      %v298 = vld [vmem:[%s263 + $0x8] sm:$0xff]
      %v299 = vld [vmem:[%s263 + $0x10] sm:$0xff]
      %v300 = vld [vmem:[%s263 + $0x18] sm:$0xff]
      %v301 = vld [vmem:[%s275] sm:$0xff]
      %v302 = vld [vmem:[%s275 + $0x8] sm:$0xff]
      %v303 = vld [vmem:[%s275 + $0x10] sm:$0xff]
      %v304 = vld [vmem:[%s275 + $0x18] sm:$0xff]
      %s305 = sadd.s32 %s20, %s21
      %s306 = smul.u32 %s305, 32
      %v307 = vlaneseq
      %v308 = vshrl.u32 %v307, 7
      %v309 = vadd.s32 %v308, 8
      %v310 = vadd.s32 %v308, 16
      %v311 = vadd.s32 %v308, 24
      %v312 = vstv %s306
      %v313 = vadd.s32 %v312, %v308
      %v314 = vadd.s32 %v312, %v309
      %v315 = vadd.s32 %v312, %v310
      %v316 = vadd.s32 %v312, %v311
      %vm317 = vcmp.lt.s32.totalorder %v313, 30
      %vm318 = vcmp.lt.s32.totalorder %v314, 30
      %vm319 = vcmp.lt.s32.totalorder %v315, 30
      %vm320 = vcmp.lt.s32.totalorder %v316, 30
      %321 = vmax.xlane.f32.xlu0 %v297
      %v322 = vpop.xlane.xlu0 %321
      %323 = vmax.xlane.f32.xlu0 %v298
      %v324 = vpop.xlane.xlu0 %323
      %325 = vmax.xlane.f32.xlu0 %v299
      %v326 = vpop.xlane.xlu0 %325
      %327 = vmax.xlane.f32.xlu0 %v300
      %v328 = vpop.xlane.xlu0 %327
      %v329 = vlaneseq
      %v330 = vand.u32 %v329, 127
      %331 = vset.pattern.permute.xlu0 0
      %332 = vperm.xlu0 %331, %v301
      %v333 = vpop.permute.xlu0 %332
      %334 = vset.pattern.permute.xlu0 0
      %335 = vperm.xlu0 %334, %v302
      %v336 = vpop.permute.xlu0 %335
      %337 = vset.pattern.permute.xlu0 0
      %338 = vperm.xlu0 %337, %v303
      %v339 = vpop.permute.xlu0 %338
      %340 = vset.pattern.permute.xlu0 0
      %341 = vperm.xlu0 %340, %v304
      %v342 = vpop.permute.xlu0 %341
      %vm343 = vcmp.eq.s32.totalorder %v330, %v333
      %vm344 = vcmp.eq.s32.totalorder %v330, %v336
      %vm345 = vcmp.eq.s32.totalorder %v330, %v339
      %vm346 = vcmp.eq.s32.totalorder %v330, %v342
      %v347 = vsel %vm343, %v297, 0.0
      %v348 = vsel %vm344, %v298, 0.0
      %v349 = vsel %vm345, %v299, 0.0
      %v350 = vsel %vm346, %v300, 0.0
      %351 = vadd.xlane.f32.xlu0 %v347
      %v352 = vpop.xlane.xlu0 %351
      %353 = vadd.xlane.f32.xlu0 %v348
      %v354 = vpop.xlane.xlu0 %353
      %355 = vadd.xlane.f32.xlu0 %v349
      %v356 = vpop.xlane.xlu0 %355
      %357 = vadd.xlane.f32.xlu0 %v350
      %v358 = vpop.xlane.xlu0 %357
      %v359 = vsub.f32 %v297, %v322
      %v360 = vsub.f32 %v298, %v324
      %v361 = vsub.f32 %v299, %v326
      %v362 = vsub.f32 %v300, %v328
      %v363 = vmul.f32 %v359, 1.442695
      %v364 = vpow.pop %v363
      %v365 = vmul.f32 %v360, 1.442695
      %v366 = vpow.pop %v365
      %v367 = vmul.f32 %v361, 1.442695
      %v368 = vpow.pop %v367
      %v369 = vmul.f32 %v362, 1.442695
      %v370 = vpow.pop %v369
      %371 = vadd.xlane.f32.xlu0 %v364
      %v372 = vpop.xlane.xlu0 %371
      %373 = vadd.xlane.f32.xlu0 %v366
      %v374 = vpop.xlane.xlu0 %373
      %375 = vadd.xlane.f32.xlu0 %v368
      %v376 = vpop.xlane.xlu0 %375
      %377 = vadd.xlane.f32.xlu0 %v370
      %v378 = vpop.xlane.xlu0 %377
      %v379 = vlog2.pop %v372
      %v380 = vmul.f32 %v379, 0.6931472
      %v381 = vlog2.pop %v374
      %v382 = vmul.f32 %v381, 0.6931472
      %v383 = vlog2.pop %v376
      %v384 = vmul.f32 %v383, 0.6931472
      %v385 = vlog2.pop %v378
      %v386 = vmul.f32 %v385, 0.6931472
      %387 = vadd.xlane.f32.xlu0 %v359
      %v388 = vpop.xlane.xlu0 %387
      %389 = vadd.xlane.f32.xlu0 %v360
      %v390 = vpop.xlane.xlu0 %389
      %391 = vadd.xlane.f32.xlu0 %v361
      %v392 = vpop.xlane.xlu0 %391
      %393 = vadd.xlane.f32.xlu0 %v362
      %v394 = vpop.xlane.xlu0 %393
      %v395 = vmul.f32 %v380, 128.0
      %v396 = vmul.f32 %v382, 128.0
      %v397 = vmul.f32 %v384, 128.0
      %v398 = vmul.f32 %v386, 128.0
      %v399 = vsub.f32 %v395, %v388
      %v400 = vsub.f32 %v396, %v390
      %v401 = vsub.f32 %v397, %v392
      %v402 = vsub.f32 %v398, %v394
      %v403 = vsel %vm317, %v399, 0.0
      %v404 = vsel %vm318, %v400, 0.0
      %v405 = vsel %vm319, %v401, 0.0
      %v406 = vsel %vm320, %v402, 0.0
      %v407 = vsub.f32 %v352, %v322
      %v408 = vsub.f32 %v354, %v324
      %v409 = vsub.f32 %v356, %v326
      %v410 = vsub.f32 %v358, %v328
      %vm411 = vcmp.ne.s32.totalorder %v301, 4294967196
      %vm412 = vcmp.ne.s32.totalorder %v302, 4294967196
      %vm413 = vcmp.ne.s32.totalorder %v303, 4294967196
      %vm414 = vcmp.ne.s32.totalorder %v304, 4294967196
      %vm415 = vmand %vm411, %vm317
      %vm416 = vmand %vm412, %vm318
      %vm417 = vmand %vm413, %vm319
      %vm418 = vmand %vm414, %vm320
      %v419 = vsub.f32 %v380, %v407
      %v420 = vsub.f32 %v382, %v408
      %v421 = vsub.f32 %v384, %v409
      %v422 = vsub.f32 %v386, %v410
      %v423 = vsel %vm415, %v419, 0.0
      %v424 = vsel %vm416, %v420, 0.0
      %v425 = vsel %vm417, %v421, 0.0
      %v426 = vsel %vm418, %v422, 0.0
      %v427 = vld [vmem:[%s282] sm:$0x1]
      %v428 = vadd.f32 %v403, %v404
      %v429 = vadd.f32 %v428, %v405
      %v430 = vadd.f32 %v429, %v406
      %v431 = vrot.slane %v430, 4
      %v432 = vadd.f32 %v430, %v431
      %v433 = vrot.slane %v432, 2
      %v434 = vadd.f32 %v432, %v433
      %v435 = vrot.slane %v434, 1
      %v436 = vadd.f32 %v434, %v435
      %v437 = vadd.f32 %v427, %v436
      %vm438 = vcmask 0
      %439 = vst.msk [vmem:[%s282] sm:$0x1] %vm438, %v437
      %v440 = vld [vmem:[%s285] sm:$0x1]
      %vm441 = vcmask 7168
      %v442 = vsel %vm441, %v423, 0.0
      %v443 = vsel %vm441, %v424, 0.0
      %v444 = vadd.f32 %v442, %v443
      %v445 = vsel %vm441, %v425, 0.0
      %v446 = vadd.f32 %v444, %v445
      %v447 = vsel %vm441, %v426, 0.0
      %v448 = vadd.f32 %v446, %v447
      %v449 = vrot.slane %v448, 4
      %v450 = vadd.f32 %v448, %v449
      %v451 = vrot.slane %v450, 2
      %v452 = vadd.f32 %v450, %v451
      %v453 = vrot.slane %v452, 1
      %v454 = vadd.f32 %v452, %v453
      %v455 = vadd.f32 %v440, %v454
      %456 = vst.msk [vmem:[%s285] sm:$0x1] %vm438, %v455
      %v457 = vld [vmem:[%s288] sm:$0x1]
      %v458 = vsel %vm415, 1, 0
      %v459 = vsel %vm416, 1, 0
      %v460 = vsel %vm417, 1, 0
      %v461 = vsel %vm418, 1, 0
      %v462 = vcvt.s32.f32 %v458
      %v463 = vcvt.s32.f32 %v459
      %v464 = vcvt.s32.f32 %v460
      %v465 = vcvt.s32.f32 %v461
      %v466 = vsel %vm441, %v462, 0.0
      %v467 = vsel %vm441, %v463, 0.0
      %v468 = vadd.f32 %v466, %v467
      %v469 = vsel %vm441, %v464, 0.0
      %v470 = vadd.f32 %v468, %v469
      %v471 = vsel %vm441, %v465, 0.0
      %v472 = vadd.f32 %v470, %v471
      %v473 = vrot.slane %v472, 4
      %v474 = vadd.f32 %v472, %v473
      %v475 = vrot.slane %v474, 2
      %v476 = vadd.f32 %v474, %v475
      %v477 = vrot.slane %v476, 1
      %v478 = vadd.f32 %v476, %v477
      %v479 = vadd.f32 %v457, %v478
      %480 = vst.msk [vmem:[%s288] sm:$0x1] %vm438, %v479
      %p481 = scmp.lt.s32.totalorder %s20, 1
      %s482 = scalar_select %p481, %s20, 1
      %s483 = scalar_lea.vmem %s2, %s482
      %p484 = scmp.lt.s32.totalorder %s20, 1
      %s485 = scalar_select %p484, %s20, 1
      %s486 = scalar_lea.vmem %s3, %s485
      %p487 = scmp.lt.s32.totalorder %s20, 1
      %s488 = scalar_select %p487, %s20, 1
      %s489 = scalar_lea.vmem %s4, %s488
      // Predicated region
      $region33: #{tpu_custom_call.1} parent=27 // pred_check
        %p490 = pneg %p110
      $region34: #{tpu_custom_call.1} parent=27 // pred_check_branch
        %492 = sbr.rel (%p490) target = $region36
      $region35: #{tpu_custom_call.1} parent=27 // pred_region
        _
      $region36: #{tpu_custom_call.1} parent=27 // pred_fallthru
        _
      // Predicated region
      $region37: #{tpu_custom_call.1} parent=27 // pred_check
        %p493 = pneg %p136
      $region38: #{tpu_custom_call.1} parent=27 // pred_check_branch
        %495 = sbr.rel (%p493) target = $region40
      $region39: #{tpu_custom_call.1} parent=27 // pred_region
        _
      $region40: #{tpu_custom_call.1} parent=27 // pred_fallthru
        _
      // Predicated region
      $region41: #{tpu_custom_call.1} parent=27 // pred_check
        %p496 = pneg %p162
      $region42: #{tpu_custom_call.1} parent=27 // pred_check_branch
        %498 = sbr.rel (%p496) target = $region44
      $region43: #{tpu_custom_call.1} parent=27 // pred_region
        _
      $region44: #{tpu_custom_call.1} parent=27 // pred_fallthru
        _
    $region28: #{tpu_custom_call.1} parent=5 // pred_fallthru
      _
    %p499 = scmp.le.s32.totalorder 2, %s11
    // Predicated region
    $region45: #{tpu_custom_call.1} parent=5 // pred_check
      %p500 = pneg %p499
    $region46: #{tpu_custom_call.1} parent=5 // pred_check_branch
      %502 = sbr.rel (%p500) target = $region48
    $region47: #{tpu_custom_call.1} parent=5 // pred_region
      %s503 = ssub.s32 %s11, 2
      // Predicated region
      $region49: #{tpu_custom_call.1} parent=47 // pred_check
        %p504 = pneg %p116
      $region50: #{tpu_custom_call.1} parent=47 // pred_check_branch
        %506 = sbr.rel (%p504) target = $region52
      $region51: #{tpu_custom_call.1} parent=47 // pred_region
        %p507 = scmp.lt.s32.totalorder %s22, 1
        %s508 = scalar_select %p507, %s22, 1
        %s509 = scalar_lea.vmem %s2, %s508
      $region52: #{tpu_custom_call.1} parent=47 // pred_fallthru
        _
      // Predicated region
      $region53: #{tpu_custom_call.1} parent=47 // pred_check
        %p510 = pneg %p142
      $region54: #{tpu_custom_call.1} parent=47 // pred_check_branch
        %512 = sbr.rel (%p510) target = $region56
      $region55: #{tpu_custom_call.1} parent=47 // pred_region
        %p513 = scmp.lt.s32.totalorder %s22, 1
        %s514 = scalar_select %p513, %s22, 1
        %s515 = scalar_lea.vmem %s3, %s514
      $region56: #{tpu_custom_call.1} parent=47 // pred_fallthru
        _
      // Predicated region
      $region57: #{tpu_custom_call.1} parent=47 // pred_check
        %p516 = pneg %p168
      $region58: #{tpu_custom_call.1} parent=47 // pred_check_branch
        %518 = sbr.rel (%p516) target = $region60
      $region59: #{tpu_custom_call.1} parent=47 // pred_region
        %p519 = scmp.lt.s32.totalorder %s22, 1
        %s520 = scalar_select %p519, %s22, 1
        %s521 = scalar_lea.vmem %s4, %s520
      $region60: #{tpu_custom_call.1} parent=47 // pred_fallthru
        _
    $region48: #{tpu_custom_call.1} parent=5 // pred_fallthru
      _
  $region6: #{tpu_custom_call.1} parent=0 // loop_footer
    %s15 = sadd.s32 1, %s11
  $region7: #{tpu_custom_call.1} parent=0 // loop_footer_branch
    %10 = sbr.rel target = $region3
  $region8: #{tpu_custom_call.1} parent=0 // loop_exit
    _

</llo_original>
